<compile_context>
chip_gen: v5e
topology: v5e:2x2
jax: 0.10.0
libtpu: 0.0.40
codegen_flags: <defaults>
</compile_context>

<pallas_src>
import math
from dataclasses import dataclass
from typing import Dict, List, Optional

import jax
import jax.numpy as jnp
from jax import lax
from jax.experimental import pallas as pl
from jax.experimental.pallas import tpu as pltpu


@dataclass
class DistillationConfig:
    """Configuration for knowledge distillation (mirror of the PyTorch dataclass)."""
    temperature: float = 4.0
    alpha: float = 0.7
    beta: float = 0.3
    use_response_distillation: bool = True
    use_feature_distillation: bool = True
    use_attention_distillation: bool = False
    use_hidden_state_distillation: bool = False
    feature_layers: Optional[List[int]] = None
    student_layers: Optional[List[int]] = None
    feature_loss_weight: float = 0.1
    use_progressive: bool = False
    progressive_epochs: Optional[List[int]] = None
    progressive_temperatures: Optional[List[float]] = None
    use_self_distillation: bool = False
    ensemble_size: int = 3
    use_augmentation: bool = True
    noise_std: float = 0.01
    use_adaptive_temperature: bool = False
    temp_schedule: str = 'cosine'
    min_temperature: float = 1.0
    max_temperature: float = 8.0
    use_online_distillation: bool = False
    teacher_update_frequency: int = 100
    distillation_loss_fn: str = 'kl_div'
    feature_loss_fn: str = 'mse'


# ----------------------------------------------------------------------------
# Tiling helpers
# ----------------------------------------------------------------------------

_VMEM_LIMIT_BYTES = 48 * 1024 * 1024   # explicit cap; safe on v5e/v6e (128 MiB) & v7x (64 MiB)
_TILE_BYTE_BUDGET = 4 * 1024 * 1024    # per-operand tile cap so double-buffering fits VMEM
_EPS2 = 1e-16                          # == (1e-8)^2 : clamp each squared norm (torch eps=1e-8)


def _round_up(x, m):
    return ((x + m - 1) // m) * m


def _flatten_rows(x):
    return x.reshape(-1, x.shape[-1])


def _pick_row_tile(n_rows, bytes_per_row):
    """Largest multiple-of-8 row tile (<=512) whose per-operand tile fits the budget."""
    limit = _round_up(n_rows, 8)
    for cand in (512, 256, 128, 64, 32, 16, 8):
        if cand <= limit and cand * bytes_per_row <= _TILE_BYTE_BUDGET:
            return cand
    return 8


def _pick_k_tile(ds, dt, itemsize):
    """Contraction tile for the projection matmul (256-wide feeds v6e/v7x MXU)."""
    if ds % 128 != 0:
        return ds                      # unaligned hidden dim: keep full contraction dim
    for cand in (256, 128):
        if ds % cand == 0 and cand * dt * itemsize <= 8 * 1024 * 1024:
            return cand
    return 128


def _pad_rows(x, m_pad):
    m = x.shape[0]
    return x if m == m_pad else jnp.pad(x, ((0, m_pad - m), (0, 0)))


# ----------------------------------------------------------------------------
# Pallas kernels (per-row partial outputs, f32)
# ----------------------------------------------------------------------------

def _sqerr_rows_kernel(s_ref, t_ref, out_ref):
    """out[r, 0] = sum_d (s[r, d] - t[r, d])^2  (diff in input dtype, square in f32)."""
    diff = (s_ref[...] - t_ref[...]).astype(jnp.float32)
    out_ref[...] = jnp.sum(diff * diff, axis=-1, keepdims=True)


def _cosine_rows_kernel(s_ref, t_ref, out_ref):
    """out[r, 0] = cosine_similarity(s[r], t[r]) using EUP rsqrt."""
    s = s_ref[...]
    t = t_ref[...]
    dot = jnp.sum((s * t).astype(jnp.float32), axis=-1, keepdims=True)
    ss = jnp.sum((s * s).astype(jnp.float32), axis=-1, keepdims=True)
    tt = jnp.sum((t * t).astype(jnp.float32), axis=-1, keepdims=True)
    eps2 = jnp.float32(_EPS2)
    out_ref[...] = (dot * lax.rsqrt(jnp.maximum(ss, eps2))
                        * lax.rsqrt(jnp.maximum(tt, eps2)))


def _rowsq_kernel(x_ref, out_ref):
    """out[r, 0] = sum_d x[r, d]^2   (attention-transfer map)."""
    x = x_ref[...]
    out_ref[...] = jnp.sum((x * x).astype(jnp.float32), axis=-1, keepdims=True)


def _make_proj_rows_kernel(kind):
    """Fused (x @ w + b) -> per-row reduction.  kind: 'sqerr' | 'cos' | 'rowsq'.

    Grid is (row_tiles, k_tiles); the f32 accumulator scratch carries the matmul
    over the contraction ('arbitrary') axis, finalize runs at the last k step.
    """

    def accumulate(x_ref, w_ref, acc_ref):
        @pl.when(pl.program_id(1) == 0)
        def _():
            acc_ref[...] = jnp.zeros_like(acc_ref)

        # No f32 up-cast: operands stay in their input dtype (native MXU path for
        # bf16 inputs); accumulation is f32 via preferred_element_type.
        acc_ref[...] += jnp.dot(x_ref[...], w_ref[...],
                                preferred_element_type=jnp.float32)

    def finalize(proj, t_ref, out_ref):
        if kind == 'sqerr':
            diff = proj - t_ref[...].astype(jnp.float32)
            out_ref[...] = jnp.sum(diff * diff, axis=-1, keepdims=True)
        elif kind == 'cos':
            t = t_ref[...].astype(jnp.float32)
            dot = jnp.sum(proj * t, axis=-1, keepdims=True)
            ss = jnp.sum(proj * proj, axis=-1, keepdims=True)
            tt = jnp.sum(t * t, axis=-1, keepdims=True)
            eps2 = jnp.float32(_EPS2)
            out_ref[...] = (dot * lax.rsqrt(jnp.maximum(ss, eps2))
                                * lax.rsqrt(jnp.maximum(tt, eps2)))
        else:  # 'rowsq'
            out_ref[...] = jnp.sum(proj * proj, axis=-1, keepdims=True)

    if kind == 'rowsq':
        def kernel(x_ref, w_ref, b_ref, out_ref, acc_ref):
            accumulate(x_ref, w_ref, acc_ref)

            @pl.when(pl.program_id(1) == pl.num_programs(1) - 1)
            def _():
                finalize(acc_ref[...] + b_ref[...].astype(jnp.float32), None, out_ref)
    else:
        def kernel(x_ref, w_ref, b_ref, t_ref, out_ref, acc_ref):
            accumulate(x_ref, w_ref, acc_ref)

            @pl.when(pl.program_id(1) == pl.num_programs(1) - 1)
            def _():
                finalize(acc_ref[...] + b_ref[...].astype(jnp.float32), t_ref, out_ref)

    return kernel


# ----------------------------------------------------------------------------
# pallas_call wrappers (row-tiled grids, per-row partials)
# ----------------------------------------------------------------------------

def _pair_row_partials(kernel, s2d, t2d, *, flops_per_elem, transcendentals_per_row=0):
    """Run a two-operand per-row kernel over a row-tiled 'parallel' grid."""
    m, d = s2d.shape
    itemsize = max(s2d.dtype.itemsize, t2d.dtype.itemsize)
    tm = _pick_row_tile(m, 2 * d * itemsize)
    m_pad = _round_up(m, tm)
    sp, tp = _pad_rows(s2d, m_pad), _pad_rows(t2d, m_pad)
    nm = m_pad // tm
    rows = pl.pallas_call(
        kernel,
        out_shape=jax.ShapeDtypeStruct((m_pad, 1), jnp.float32),
        grid=(nm,),
        in_specs=[pl.BlockSpec((tm, d), lambda i: (i, 0)),
                  pl.BlockSpec((tm, d), lambda i: (i, 0))],
        out_specs=pl.BlockSpec((tm, 1), lambda i: (i, 0)),
        compiler_params=pltpu.CompilerParams(
            dimension_semantics=("parallel",),
            vmem_limit_bytes=_VMEM_LIMIT_BYTES),
        cost_estimate=pl.CostEstimate(
            flops=flops_per_elem * m_pad * d,
            transcendentals=transcendentals_per_row * m_pad,
            bytes_accessed=(sp.size * sp.dtype.itemsize
                            + tp.size * tp.dtype.itemsize + m_pad * 4)),
    )(sp, tp)
    return rows[:m, 0]


def _rowsq_partials(x2d):
    m, d = x2d.shape
    tm = _pick_row_tile(m, d * x2d.dtype.itemsize)
    m_pad = _round_up(m, tm)
    xp = _pad_rows(x2d, m_pad)
    nm = m_pad // tm
    rows = pl.pallas_call(
        _rowsq_kernel,
        out_shape=jax.ShapeDtypeStruct((m_pad, 1), jnp.float32),
        grid=(nm,),
        in_specs=[pl.BlockSpec((tm, d), lambda i: (i, 0))],
        out_specs=pl.BlockSpec((tm, 1), lambda i: (i, 0)),
        compiler_params=pltpu.CompilerParams(
            dimension_semantics=("parallel",),
            vmem_limit_bytes=_VMEM_LIMIT_BYTES),
        cost_estimate=pl.CostEstimate(
            flops=2 * m_pad * d, transcendentals=0,
            bytes_accessed=xp.size * xp.dtype.itemsize + m_pad * 4),
    )(xp)
    return rows[:m, 0]


def _proj_row_partials(x2d, w_t, b, t2d, kind):
    """Fused projection + per-row reduction.  x2d: (M, Ds), w_t: (Ds, Dt), b: (Dt,)."""
    m, ds = x2d.shape
    dt = w_t.shape[1]
    itemsize = x2d.dtype.itemsize
    # Row tile bounded by the widest per-row operand (f32 accumulator / teacher tile).
    tm = _pick_row_tile(m, max(dt * 4, ds * itemsize))
    m_pad = _round_up(m, tm)
    nm = m_pad // tm
    tk = _pick_k_tile(ds, dt, w_t.dtype.itemsize)
    nk = ds // tk

    xp = _pad_rows(x2d, m_pad)
    b2d = b.reshape(1, dt)

    operands = [xp, w_t, b2d]
    in_specs = [pl.BlockSpec((tm, tk), lambda i, k: (i, k)),
                pl.BlockSpec((tk, dt), lambda i, k: (k, 0)),   # weight: independent of i
                pl.BlockSpec((1, dt), lambda i, k: (0, 0))]
    bytes_accessed = (xp.size * xp.dtype.itemsize + w_t.size * w_t.dtype.itemsize
                      + b.size * b.dtype.itemsize + m_pad * 4)
    if kind != 'rowsq':
        tp = _pad_rows(t2d, m_pad)
        operands.append(tp)
        in_specs.append(pl.BlockSpec((tm, dt), lambda i, k: (i, 0)))  # same block over k
        bytes_accessed += tp.size * tp.dtype.itemsize

    rows = pl.pallas_call(
        _make_proj_rows_kernel(kind),
        out_shape=jax.ShapeDtypeStruct((m_pad, 1), jnp.float32),
        grid=(nm, nk),
        in_specs=in_specs,
        out_specs=pl.BlockSpec((tm, 1), lambda i, k: (i, 0)),
        scratch_shapes=[pltpu.VMEM((tm, dt), jnp.float32)],
        compiler_params=pltpu.CompilerParams(
            dimension_semantics=("parallel", "arbitrary"),
            vmem_limit_bytes=_VMEM_LIMIT_BYTES),
        cost_estimate=pl.CostEstimate(
            flops=2 * m_pad * ds * dt + 4 * m_pad * dt,
            transcendentals=2 * m_pad if kind == 'cos' else 0,
            bytes_accessed=bytes_accessed),
    )(*operands)
    return rows[:m, 0]


# ----------------------------------------------------------------------------
# Loss functions (scalar glue around the per-row Pallas partials)
# ----------------------------------------------------------------------------

def mse_loss(student, teacher):
    s, t = _flatten_rows(student), _flatten_rows(teacher)
    sq = _pair_row_partials(_sqerr_rows_kernel, s, t, flops_per_elem=3)
    return jnp.sum(sq) / jnp.float32(t.size)


def cosine_loss(student, teacher):
    s, t = _flatten_rows(student), _flatten_rows(teacher)
    cos = _pair_row_partials(_cosine_rows_kernel, s, t,
                             flops_per_elem=8, transcendentals_per_row=2)
    return jnp.float32(1.0) - jnp.mean(cos)


def proj_mse_loss(student, w_t, b, teacher):
    x, t = _flatten_rows(student), _flatten_rows(teacher)
    sq = _proj_row_partials(x, w_t, b, t, 'sqerr')
    return jnp.sum(sq) / jnp.float32(t.size)


def proj_cosine_loss(student, w_t, b, teacher):
    x, t = _flatten_rows(student), _flatten_rows(teacher)
    cos = _proj_row_partials(x, w_t, b, t, 'cos')
    return jnp.float32(1.0) - jnp.mean(cos)


def attention_transfer_loss(student, teacher, proj=None):
    """Zagoruyko & Komodakis attention transfer: MSE of per-sample L2-normalized
    attention maps, map = sum(feat^2, dim=-1)."""
    batch = student.shape[0]
    s2d, t2d = _flatten_rows(student), _flatten_rows(teacher)
    if proj is not None:
        w_t, b = proj
        s_att = _proj_row_partials(s2d, w_t, b, None, 'rowsq')
    else:
        s_att = _rowsq_partials(s2d)
    t_att = _rowsq_partials(t2d)
    s_att = s_att.reshape(batch, -1)
    t_att = t_att.reshape(batch, -1)
    eps = jnp.float32(1e-12)
    s_att = s_att / jnp.maximum(jnp.linalg.norm(s_att, axis=1, keepdims=True), eps)
    t_att = t_att / jnp.maximum(jnp.linalg.norm(t_att, axis=1, keepdims=True), eps)
    # TODO(synk): the tiny (batch, seq) normalize + MSE stays in plain JAX; the
    # feature-sized reductions above are the Pallas hot path.
    return jnp.mean((s_att - t_att) ** 2)


# ----------------------------------------------------------------------------
# Module-equivalent class
# ----------------------------------------------------------------------------

class FeatureDistillationLoss:
    """JAX/Pallas port of the PyTorch FeatureDistillationLoss module."""

    def __init__(self, config: DistillationConfig):
        self.config = config
        self.projections: Dict[str, tuple] = {}

    def add_projection(self, name: str, student_dim: int, teacher_dim: int, key):
        # Deterministic nn.Linear-style init: U(-1/sqrt(in), 1/sqrt(in)).
        kw, kb = jax.random.split(key)
        bound = 1.0 / math.sqrt(student_dim)
        w = jax.random.uniform(kw, (teacher_dim, student_dim), jnp.float32, -bound, bound)
        b = jax.random.uniform(kb, (teacher_dim,), jnp.float32, -bound, bound)
        # Store W^T so kernels compute x @ (student_dim, teacher_dim) directly.
        self.projections[name] = (w.T, b)

    def __call__(self,
                 student_features: Dict[str, jnp.ndarray],
                 teacher_features: Dict[str, jnp.ndarray]) -> Dict[str, jnp.ndarray]:
        # TODO(synk): many tiny feature layers could be concatenated into one
        # kernel launch per loss type to amortize per-call overhead.
        feature_losses = {}
        for name in student_features:
            if name not in teacher_features:
                continue
            s = student_features[name]
            t = teacher_features[name]
            proj = self.projections.get(name)
            fn = self.config.feature_loss_fn

            if fn == 'cosine':
                loss = (proj_cosine_loss(s, proj[0], proj[1], t)
                        if proj is not None else cosine_loss(s, t))
            elif fn == 'attention_transfer':
                loss = attention_transfer_loss(s, t, proj)
            else:  # 'mse' and any unknown loss name fall back to MSE (matches PyTorch)
                loss = (proj_mse_loss(s, proj[0], proj[1], t)
                        if proj is not None else mse_loss(s, t))

            feature_losses[f'{name}_loss'] = loss

        if feature_losses:
            total = None
            for v in feature_losses.values():
                total = v if total is None else total + v
            feature_losses['total_feature_loss'] = total
        return feature_losses


# ----------------------------------------------------------------------------
# Demo / correctness check
# ----------------------------------------------------------------------------

if __name__ == "__main__":
    key = jax.random.PRNGKey(0)
    k1, k2, k3, k4, kproj = jax.random.split(key, 5)

    # 24 rows -> two 16-row tiles + 8 padded rows (exercises row padding).
    B, S = 2, 12
    ds1, dt1 = 384, 128     # layer1: projection 384 -> 128, contraction grid of 3
    d2 = 64                 # layer2: dims already match (full-dim lane block)

    student_features = {
        'layer1': jax.random.normal(k1, (B, S, ds1), jnp.float32),
        'layer2': jax.random.normal(k2, (B, S, d2), jnp.float32),
    }
    teacher_features = {
        'layer1': jax.random.normal(k3, (B, S, dt1), jnp.float32),
        'layer2': jax.random.normal(k4, (B, S, d2), jnp.float32),
    }

    # Round the matmul operands to bf16-representable f32 values so the Pallas MXU
    # matmul and the XLA reference matmul agree up to f32 accumulation order
    # regardless of default matmul precision (keeps the asserts tight).
    student_features['layer1'] = (
        student_features['layer1'].astype(jnp.bfloat16).astype(jnp.float32))

    base = FeatureDistillationLoss(DistillationConfig())
    base.add_projection('layer1', ds1, dt1, kproj)
    w_t, b = base.projections['layer1']
    w_t = w_t.astype(jnp.bfloat16).astype(jnp.float32)
    base.projections['layer1'] = (w_t, b)

    # Pure-JAX references.
    s1 = student_features['layer1'].reshape(-1, ds1)
    t1 = teacher_features['layer1'].reshape(-1, dt1)
    p1 = jnp.dot(s1, w_t, preferred_element_type=jnp.float32,
                 precision=lax.Precision.HIGHEST) + b
    s2 = student_features['layer2'].reshape(-1, d2)
    t2 = teacher_features['layer2'].reshape(-1, d2)

    def ref_mse(a, c):
        return jnp.mean((a - c) ** 2)

    def ref_cos(a, c):
        eps2 = jnp.float32(_EPS2)
        dot = jnp.sum(a * c, axis=-1)
        ss = jnp.sum(a * a, axis=-1)
        tt = jnp.sum(c * c, axis=-1)
        cos = dot * lax.rsqrt(jnp.maximum(ss, eps2)) * lax.rsqrt(jnp.maximum(tt, eps2))
        return jnp.float32(1.0) - jnp.mean(cos)

    def ref_att(a, c, batch):
        sa = jnp.sum(a * a, axis=-1).reshape(batch, -1)
        ta = jnp.sum(c * c, axis=-1).reshape(batch, -1)
        eps = jnp.float32(1e-12)
        sa = sa / jnp.maximum(jnp.linalg.norm(sa, axis=1, keepdims=True), eps)
        ta = ta / jnp.maximum(jnp.linalg.norm(ta, axis=1, keepdims=True), eps)
        return jnp.mean((sa - ta) ** 2)

    refs = {
        'mse': (ref_mse(p1, t1), ref_mse(s2, t2)),
        'cosine': (ref_cos(p1, t1), ref_cos(s2, t2)),
        'attention_transfer': (ref_att(p1, t1, B), ref_att(s2, t2, B)),
    }

    for fn_name, (r1, r2) in refs.items():
        mod = FeatureDistillationLoss(DistillationConfig(feature_loss_fn=fn_name))
        mod.projections = base.projections
        out = mod(student_features, teacher_features)
        out = jax.tree_util.tree_map(jax.block_until_ready, out)
        assert jnp.allclose(out['layer1_loss'], r1, rtol=5e-4, atol=1e-5), \
            (fn_name, out['layer1_loss'], r1)
        assert jnp.allclose(out['layer2_loss'], r2, rtol=5e-4, atol=1e-5), \
            (fn_name, out['layer2_loss'], r2)
        assert jnp.allclose(out['total_feature_loss'], r1 + r2, rtol=5e-4, atol=1e-5), \
            (fn_name, out['total_feature_loss'], r1 + r2)

    print("KERNEL_OK")
</pallas_src>

<mosaic_0001>
module attributes {stable_mosaic.version = 11 : i64} {
  func.func @kernel(%arg0: i32, %arg1: i32, %arg2: memref<16x128xf32, #tpu.memory_space<vmem>>, %arg3: memref<128x128xf32, #tpu.memory_space<vmem>>, %arg4: memref<1x128xf32, #tpu.memory_space<vmem>>, %arg5: memref<16x128xf32, #tpu.memory_space<vmem>>, %arg6: memref<16x1xf32, #tpu.memory_space<vmem>>, %arg7: memref<16x128xf32, #tpu.memory_space<vmem>>) attributes {dimension_semantics = [#tpu.dimension_semantics<parallel>, #tpu.dimension_semantics<arbitrary>], iteration_bounds = array<i64: 2, 3>, scalar_prefetch = 0 : i64, scratch_operands = 1 : i64, tpu.core_type = #tpu.core_type<tc>, window_params = [{transform_indices = @transform_0, window_bounds = array<i64: 16, 128>}, {transform_indices = @transform_1, window_bounds = array<i64: 128, 128>}, {pipeline_mode = #tpu.pipeline_mode<synchronous>, transform_indices = @transform_2, window_bounds = array<i64: 1, 128>}, {transform_indices = @transform_3, window_bounds = array<i64: 16, 128>}, {transform_indices = @transform_4, window_bounds = array<i64: 16, 1>}]} {
    %c0_i32 = arith.constant 0 : i32
    %0 = arith.cmpi eq, %arg1, %c0_i32 : i32
    %1 = arith.extui %0 : i1 to i32
    %c0_i32_0 = arith.constant 0 : i32
    %2 = arith.cmpi ne, %1, %c0_i32_0 : i32
    scf.if %2 {
      %cst_9 = arith.constant 0.000000e+00 : f32
      %12 = vector.broadcast %cst_9 : f32 to vector<16x128xf32>
      %c0_10 = arith.constant 0 : index
      %c0_11 = arith.constant 0 : index
      %13 = vector.load %arg7[%c0_10, %c0_11] : memref<16x128xf32, #tpu.memory_space<vmem>>, vector<16x128xf32>
      tpu.vector_store %arg7[%c0_10, %c0_11], %12 {strides = array<i32>} : memref<16x128xf32, #tpu.memory_space<vmem>>, vector<16x128xf32>,
    } else {
    }
    %c0 = arith.constant 0 : index
    %c0_1 = arith.constant 0 : index
    %3 = vector.load %arg7[%c0, %c0_1] : memref<16x128xf32, #tpu.memory_space<vmem>>, vector<16x128xf32>
    %c0_2 = arith.constant 0 : index
    %c0_3 = arith.constant 0 : index
    %4 = vector.load %arg2[%c0_2, %c0_3] : memref<16x128xf32, #tpu.memory_space<vmem>>, vector<16x128xf32>
    %c0_4 = arith.constant 0 : index
    %c0_5 = arith.constant 0 : index
    %5 = vector.load %arg3[%c0_4, %c0_5] : memref<128x128xf32, #tpu.memory_space<vmem>>, vector<128x128xf32>
    %cst = arith.constant dense<0.000000e+00> : vector<16x128xf32>
    %6 = tpu.matmul %4, %5, %cst {dimension_numbers = #tpu.dot_dimension_numbers<[1], [0], [0], [1], [0, 0, 1, 1], [], []>} : vector<16x128xf32>, vector<128x128xf32>, vector<16x128xf32> -> vector<16x128xf32>
    %7 = arith.addf %3, %6 : vector<16x128xf32>
    %c0_6 = arith.constant 0 : index
    %c0_7 = arith.constant 0 : index
    %8 = vector.load %arg7[%c0_6, %c0_7] : memref<16x128xf32, #tpu.memory_space<vmem>>, vector<16x128xf32>
    tpu.vector_store %arg7[%c0_6, %c0_7], %7 {strides = array<i32>} : memref<16x128xf32, #tpu.memory_space<vmem>>, vector<16x128xf32>,
    %c2_i32 = arith.constant 2 : i32
    %9 = arith.cmpi eq, %arg1, %c2_i32 : i32
    %10 = arith.extui %9 : i1 to i32
    %c0_i32_8 = arith.constant 0 : i32
    %11 = arith.cmpi ne, %10, %c0_i32_8 : i32
    scf.if %11 {
      %c0_9 = arith.constant 0 : index
      %c0_10 = arith.constant 0 : index
      %12 = vector.load %arg7[%c0_9, %c0_10] : memref<16x128xf32, #tpu.memory_space<vmem>>, vector<16x128xf32>
      %c0_11 = arith.constant 0 : index
      %c0_12 = arith.constant 0 : index
      %13 = vector.load %arg4[%c0_11, %c0_12] : memref<1x128xf32, #tpu.memory_space<vmem>>, vector<1x128xf32>
      %14 = vector.broadcast %13 : vector<1x128xf32> to vector<16x128xf32>
      %15 = arith.addf %12, %14 : vector<16x128xf32>
      %c0_13 = arith.constant 0 : index
      %c0_14 = arith.constant 0 : index
      %16 = vector.load %arg5[%c0_13, %c0_14] : memref<16x128xf32, #tpu.memory_space<vmem>>, vector<16x128xf32>
      %17 = arith.subf %15, %16 : vector<16x128xf32>
      %18 = arith.mulf %17, %17 : vector<16x128xf32>
      %cst_15 = arith.constant dense<0.000000e+00> : vector<16xf32>
      %19 = vector.multi_reduction <add>, %18, %cst_15 [1] : vector<16x128xf32> to vector<16xf32>
      %20 = vector.shape_cast %19 : vector<16xf32> to vector<16x1xf32>
      %c0_16 = arith.constant 0 : index
      %c0_17 = arith.constant 0 : index
      %21 = vector.load %arg6[%c0_16, %c0_17] : memref<16x1xf32, #tpu.memory_space<vmem>>, vector<16x1xf32>
      tpu.vector_store %arg6[%c0_16, %c0_17], %20 {strides = array<i32>} : memref<16x1xf32, #tpu.memory_space<vmem>>, vector<16x1xf32>,
    } else {
    }
    return
  }
  func.func @transform_0(%arg0: i32, %arg1: i32) -> (i32, i32) {
    %c0_i32 = arith.constant 0 : i32
    return %arg0, %arg1 : i32, i32
  }
  func.func @transform_1(%arg0: i32, %arg1: i32) -> (i32, i32) {
    %c0_i32 = arith.constant 0 : i32
    %c0_i32_0 = arith.constant 0 : i32
    return %arg1, %c0_i32 : i32, i32
  }
  func.func @transform_2(%arg0: i32, %arg1: i32) -> (i32, i32) {
    %c0_i32 = arith.constant 0 : i32
    %c0_i32_0 = arith.constant 0 : i32
    %c0_i32_1 = arith.constant 0 : i32
    return %c0_i32, %c0_i32_0 : i32, i32
  }
  func.func @transform_3(%arg0: i32, %arg1: i32) -> (i32, i32) {
    %c0_i32 = arith.constant 0 : i32
    %c0_i32_0 = arith.constant 0 : i32
    return %arg0, %c0_i32 : i32, i32
  }
  func.func @transform_4(%arg0: i32, %arg1: i32) -> (i32, i32) {
    %c0_i32 = arith.constant 0 : i32
    %c0_i32_0 = arith.constant 0 : i32
    return %arg0, %c0_i32 : i32, i32
  }
}

</mosaic_0001>

<llo_original>
// kernel: tpu_custom_call.1
$region0: #{tpu_custom_call.1}
  #allocation0 [shape = 'u32[]', space=smem, size = 0x4, offset = 0x4, fixed_abs, tag = 'smem constant byte address 0x4 - core index']
  #allocation1 [shape = 'u32[72,128]{1,0:T(1,128)}', space=vmem, size = 0x9000, scoped, tag = 'internal scratch']
  #allocation2 [shape = 'f32[16,128]{1,0:T(8,128)}', space=vmem, size = 0x2000, scoped, tag = 'scratch operand']
  %s0 = inlined_call_operand.hbm [shape: f32[32,384], index: 0, kind: input, shape index: {}]
  %s1 = inlined_call_operand.hbm [shape: f32[384,128], index: 1, kind: input, shape index: {}]
  %s2 = inlined_call_operand.vmem [shape: f32[1,128], index: 2, kind: input, shape index: {}]
  %s3 = inlined_call_operand.hbm [shape: f32[32,128], index: 3, kind: input, shape index: {}]
  %s4 = inlined_call_operand.vmem [shape: f32[32,1], index: 4, kind: output, shape index: {}]
  %s5 = sld [smem:[#allocation0]]
  $region69: #{tpu_custom_call.1} parent=0
    _
  %s7 = ssub.s32 1, %s5
  %s8 = scalar_select 0, %s7, %s5
  $region1: #{tpu_custom_call.1} parent=0
    #allocation3 [shape = 'u8[16384]{0}', space=vmem, size = 0x4000, scoped, tag = 'input window, operand 0']
    #allocation4 [shape = 's32[2]{0}', space=sflag, size = 0x8, scoped, tag = 'scoped memory for tpu_custom_call.1']
    #allocation5 [shape = 'u8[131072]{0}', space=vmem, size = 0x20000, scoped, tag = 'input window, operand 1']
    #allocation6 [shape = 's32[2]{0}', space=sflag, size = 0x8, scoped, tag = 'scoped memory for tpu_custom_call.1']
    #allocation7 [shape = 'u8[16384]{0}', space=vmem, size = 0x4000, scoped, tag = 'input window, operand 3']
    %9 = vsyncpa [#allocation4], 0
    %s10 = scalar_lea.sflag [#allocation4], 1
    %11 = vsyncpa %s10, 0
    %12 = vsyncpa [#allocation6], 0
    %s13 = scalar_lea.sflag [#allocation6], 1
    %14 = vsyncpa %s13, 0
    loop: start=0, step=1, limit=8
    $region2: #{tpu_custom_call.1} parent=1 // loop_pre_header
      _
    $region3: #{tpu_custom_call.1} parent=1 // loop_header
      %s16 = sphi 0, %s20
      %p17 = scmp.ge.s32.totalorder %s16, 8
      %s23 = sphi 0, %s35
      %s24 = sphi 0, %s31
      %s25 = sphi 0, %s23
      %s26 = sphi 0, %s24
      %s27 = sphi 0, %s25
      %s28 = sphi 0, %s26
      %s40 = sphi 0, %s42
      %s43 = sphi 0, %s40
      %s44 = sphi 0, %s43
      %s60 = sphi 0, %s44
      %s66 = sphi 0, %s68
      %s69 = sphi 0, %s66
      %s70 = sphi 0, %s69
      %s86 = sphi 0, %s70
      %s90 = sphi 0, %s90
      %s92 = sphi 0, %s90
      %s93 = sphi 0, %s92
      %s107 = sphi 0, %s93
      %s113 = sphi 0, %s115
      %s116 = sphi 0, %s113
      %s117 = sphi 0, %s116
      %s133 = sphi 0, %s117
      %s139 = sphi 0, %s141
      %s142 = sphi 0, %s139
      %s143 = sphi 0, %s142
      %s159 = sphi 0, %s143
    $region4: #{tpu_custom_call.1} parent=1 // loop_header_branch
      %19 = sbr.rel (%p17) target = $region8
    $region5: #{tpu_custom_call.1} parent=1 // loop_body
      %s21 = ssub.s32 %s16, 1
      %s22 = ssub.s32 %s16, 2
      %s29 = sadd.s32 1, %s24
      %p30 = scmp.ge.s32.totalorder %s29, 3
      %s31 = scalar_select %p30, 0, %s29
      %s32 = sadd.s32 1, %s23
      %s33 = scalar_select %p30, %s32, %s23
      %p34 = scmp.ge.s32.totalorder %s33, 2
      %s35 = scalar_select %p34, 0, %s33
      %s36 = ssub.s32 %s23, %s35
      %s37 = ssub.s32 %s24, %s31
      %s38 = sor.u32 %s36, %s37
      %p39 = scmp.eq.s32.totalorder %s38, 0
      %s41 = sadd.s32 %s40, 1
      %s42 = scalar_select %p39, %s40, %s41
      %p45 = pneg %p39
      %p46 = scmp.eq.s32.totalorder %s16, 5
      %p47 = por %p45, %p46
      %p48 = scmp.ne.s32.totalorder %s40, %s43
      %p49 = scmp.eq.s32.totalorder %s16, 0
      %p50 = por %p48, %p49
      %p51 = scmp.ne.s32.totalorder %s40, %s43
      %p52 = scmp.eq.s32.totalorder %s21, 5
      %p53 = por %p51, %p52
      %p54 = scmp.ne.s32.totalorder %s43, %s44
      %p55 = scmp.eq.s32.totalorder %s21, 0
      %p56 = por %p54, %p55
      %p57 = scmp.ne.s32.totalorder %s43, %s44
      %p58 = scmp.eq.s32.totalorder %s22, 5
      %p59 = por %p57, %p58
      %p61 = scmp.ne.s32.totalorder %s44, %s60
      %p62 = scmp.eq.s32.totalorder %s22, 0
      %p63 = por %p61, %p62
      %s64 = ssub.s32 %s24, %s31
      %p65 = scmp.eq.s32.totalorder %s64, 0
      %s67 = sadd.s32 %s66, 1
      %s68 = scalar_select %p65, %s66, %s67
      %p71 = pneg %p65
      %p72 = scmp.eq.s32.totalorder %s16, 5
      %p73 = por %p71, %p72
      %p74 = scmp.ne.s32.totalorder %s66, %s69
      %p75 = scmp.eq.s32.totalorder %s16, 0
      %p76 = por %p74, %p75
      %p77 = scmp.ne.s32.totalorder %s66, %s69
      %p78 = scmp.eq.s32.totalorder %s21, 5
      %p79 = por %p77, %p78
      %p80 = scmp.ne.s32.totalorder %s69, %s70
      %p81 = scmp.eq.s32.totalorder %s21, 0
      %p82 = por %p80, %p81
      %p83 = scmp.ne.s32.totalorder %s69, %s70
      %p84 = scmp.eq.s32.totalorder %s22, 5
      %p85 = por %p83, %p84
      %p87 = scmp.ne.s32.totalorder %s70, %s86
      %p88 = scmp.eq.s32.totalorder %s22, 0
      %p89 = por %p87, %p88
      %s91 = sadd.s32 %s90, 1
      %p94 = scmp.eq.s32.totalorder %s16, 5
      %p95 = scmp.ne.s32.totalorder %s90, %s92
      %p96 = scmp.eq.s32.totalorder %s16, 0
      %p97 = por %p95, %p96
      %p98 = scmp.ne.s32.totalorder %s90, %s92
      %p99 = scmp.eq.s32.totalorder %s21, 5
      %p100 = por %p98, %p99
      %p101 = scmp.ne.s32.totalorder %s92, %s93
      %p102 = scmp.eq.s32.totalorder %s21, 0
      %p103 = por %p101, %p102
      %p104 = scmp.ne.s32.totalorder %s92, %s93
      %p105 = scmp.eq.s32.totalorder %s22, 5
      %p106 = por %p104, %p105
      %p108 = scmp.ne.s32.totalorder %s93, %s107
      %p109 = scmp.eq.s32.totalorder %s22, 0
      %p110 = por %p108, %p109
      %s111 = ssub.s32 %s23, %s35
      %p112 = scmp.eq.s32.totalorder %s111, 0
      %s114 = sadd.s32 %s113, 1
      %s115 = scalar_select %p112, %s113, %s114
      %p118 = pneg %p112
      %p119 = scmp.eq.s32.totalorder %s16, 5
      %p120 = por %p118, %p119
      %p121 = scmp.ne.s32.totalorder %s113, %s116
      %p122 = scmp.eq.s32.totalorder %s16, 0
      %p123 = por %p121, %p122
      %p124 = scmp.ne.s32.totalorder %s113, %s116
      %p125 = scmp.eq.s32.totalorder %s21, 5
      %p126 = por %p124, %p125
      %p127 = scmp.ne.s32.totalorder %s116, %s117
      %p128 = scmp.eq.s32.totalorder %s21, 0
      %p129 = por %p127, %p128
      %p130 = scmp.ne.s32.totalorder %s116, %s117
      %p131 = scmp.eq.s32.totalorder %s22, 5
      %p132 = por %p130, %p131
      %p134 = scmp.ne.s32.totalorder %s117, %s133
      %p135 = scmp.eq.s32.totalorder %s22, 0
      %p136 = por %p134, %p135
      %s137 = ssub.s32 %s23, %s35
      %p138 = scmp.eq.s32.totalorder %s137, 0
      %s140 = sadd.s32 %s139, 1
      %s141 = scalar_select %p138, %s139, %s140
      %p144 = pneg %p138
      %p145 = scmp.eq.s32.totalorder %s16, 5
      %p146 = por %p144, %p145
      %p147 = scmp.ne.s32.totalorder %s139, %s142
      %p148 = scmp.eq.s32.totalorder %s16, 0
      %p149 = por %p147, %p148
      %p150 = scmp.ne.s32.totalorder %s139, %s142
      %p151 = scmp.eq.s32.totalorder %s21, 5
      %p152 = por %p150, %p151
      %p153 = scmp.ne.s32.totalorder %s142, %s143
      %p154 = scmp.eq.s32.totalorder %s21, 0
      %p155 = por %p153, %p154
      %p156 = scmp.ne.s32.totalorder %s142, %s143
      %p157 = scmp.eq.s32.totalorder %s22, 5
      %p158 = por %p156, %p157
      %p160 = scmp.ne.s32.totalorder %s143, %s159
      %p161 = scmp.eq.s32.totalorder %s22, 0
      %p162 = por %p160, %p161
      %p163 = scmp.le.s32.totalorder 1, %s16
      %p164 = scmp.lt.s32.totalorder %s16, 7
      %p165 = pnand %p163, %p164
      %p166 = pneg %p165
      // Predicated region
      $region9: #{tpu_custom_call.1} parent=5 // pred_check
        _
      $region10: #{tpu_custom_call.1} parent=5 // pred_check_branch
        %168 = sbr.rel (%p165) target = $region12
      $region11: #{tpu_custom_call.1} parent=5 // pred_region
        %s169 = ssub.s32 %s16, 1
        // Predicated region
        $region13: #{tpu_custom_call.1} parent=11 // pred_check
          %p170 = pneg %p103
        $region14: #{tpu_custom_call.1} parent=11 // pred_check_branch
          %172 = sbr.rel (%p170) target = $region16
        $region15: #{tpu_custom_call.1} parent=11 // pred_region
          _
        $region16: #{tpu_custom_call.1} parent=11 // pred_fallthru
          _
      $region12: #{tpu_custom_call.1} parent=5 // pred_fallthru
        _
      %p173 = scmp.lt.s32.totalorder %s16, 6
      // Predicated region
      $region17: #{tpu_custom_call.1} parent=5 // pred_check
        %p174 = pneg %p173
      $region18: #{tpu_custom_call.1} parent=5 // pred_check_branch
        %176 = sbr.rel (%p174) target = $region20
      $region19: #{tpu_custom_call.1} parent=5 // pred_region
        // Predicated region
        $region21: #{tpu_custom_call.1} parent=19 // pred_check
          %p177 = pneg %p50
        $region22: #{tpu_custom_call.1} parent=19 // pred_check_branch
          %179 = sbr.rel (%p177) target = $region24
        $region23: #{tpu_custom_call.1} parent=19 // pred_region
          %s180 = sand.u32 %s40, 1
          %s181 = scalar_lea.sflag [#allocation4], %s180
          %s182 = sand.u32 %s40, 1
          %s183 = smul.addr %s182, 16
          %s184 = scalar_lea.vmem [#allocation3], %s183
          %s185 = smul.u32 2, %s23
          %187 = vsyncadd %s181, 0
          %s188 = smul.addr %s185, 3
          %s189 = sadd.s32 %s24, %s188
          %s190 = smul.addr %s189, 8
          %s191 = scalar_lea.hbm %s0, %s190
          %s192 = sshll.u32 %s191, 4
          %s193 = int_to_ptr.hbm [resolvable:$true] %s192
          %s194 = sshll.u32 %s184, 4
          %s195 = int_to_ptr.vmem [resolvable:$true] %s194
          %200 = dma.hbm_to_vmem [thread:$0]  %s193, 256, %s195, %s181, 384, 128, 8
        $region24: #{tpu_custom_call.1} parent=19 // pred_fallthru
          _
        // Predicated region
        $region25: #{tpu_custom_call.1} parent=19 // pred_check
          %p201 = pneg %p76
        $region26: #{tpu_custom_call.1} parent=19 // pred_check_branch
          %203 = sbr.rel (%p201) target = $region28
        $region27: #{tpu_custom_call.1} parent=19 // pred_region
          %s204 = sand.u32 %s16, 1
          %s205 = scalar_lea.sflag [#allocation6], %s204
          %s206 = sand.u32 %s66, 1
          %s207 = smul.addr %s206, 128
          %s208 = scalar_lea.vmem [#allocation5], %s207
          %s209 = smul.u32 16, %s24
          %211 = vsyncadd %s205, 0
          %s212 = smul.addr %s209, 8
          %s213 = scalar_lea.hbm %s1, %s212
          %s214 = sshll.u32 %s213, 4
          %s215 = int_to_ptr.hbm [resolvable:$true] %s214
          %s216 = sshll.u32 %s208, 4
          %s217 = int_to_ptr.vmem [resolvable:$true] %s216
          %222 = dma.hbm_to_vmem [thread:$0]  %s215, 2048, %s217, %s205, 128, 128, 8
        $region28: #{tpu_custom_call.1} parent=19 // pred_fallthru
          _
        // Predicated region
        $region29: #{tpu_custom_call.1} parent=19 // pred_check
          %p223 = pneg %p123
        $region30: #{tpu_custom_call.1} parent=19 // pred_check_branch
          %225 = sbr.rel (%p223) target = $region32
        $region31: #{tpu_custom_call.1} parent=19 // pred_region
          %s226 = sand.u32 %s16, 1
          %s227 = scalar_lea.sflag [#allocation6], %s226
          %s228 = sand.u32 %s113, 1
          %s229 = smul.addr %s228, 16
          %s230 = scalar_lea.vmem [#allocation7], %s229
          %s231 = smul.u32 2, %s23
          %233 = vsyncadd %s227, 0
          %s234 = smul.addr %s231, 8
          %s235 = scalar_lea.hbm %s3, %s234
          %s236 = sshll.u32 %s235, 4
          %s237 = int_to_ptr.hbm [resolvable:$true] %s236
          %s238 = sshll.u32 %s230, 4
          %s239 = int_to_ptr.vmem [resolvable:$true] %s238
          %244 = dma.hbm_to_vmem [thread:$0]  %s237, 256, %s239, %s227, 128, 128, 8
        $region32: #{tpu_custom_call.1} parent=19 // pred_fallthru
          _
      $region20: #{tpu_custom_call.1} parent=5 // pred_fallthru
        _
      %p245 = scmp.le.s32.totalorder 1, %s16
      %p246 = scmp.lt.s32.totalorder %s16, 7
      %p247 = pnand %p245, %p246
      %p248 = pneg %p247
      // Predicated region
      $region33: #{tpu_custom_call.1} parent=5 // pred_check
        _
      $region34: #{tpu_custom_call.1} parent=5 // pred_check_branch
        %250 = sbr.rel (%p247) target = $region36
      $region35: #{tpu_custom_call.1} parent=5 // pred_region
        %s251 = ssub.s32 %s16, 1
        %s252 = sand.u32 %s43, 1
        %s253 = scalar_lea.sflag [#allocation4], %s252
        %s254 = sand.u32 %s43, 1
        %s255 = smul.addr %s254, 16
        %s256 = scalar_lea.vmem [#allocation3], %s255
        // Predicated region
        $region37: #{tpu_custom_call.1} parent=35 // pred_check
          %p257 = pneg %p56
        $region38: #{tpu_custom_call.1} parent=35 // pred_check_branch
          %259 = sbr.rel (%p257) target = $region40
        $region39: #{tpu_custom_call.1} parent=35 // pred_region
          %261 = dma.done %s253, 256
        $region40: #{tpu_custom_call.1} parent=35 // pred_fallthru
          _
        %s262 = sand.u32 %s21, 1
        %s263 = scalar_lea.sflag [#allocation6], %s262
        %s264 = sand.u32 %s69, 1
        %s265 = smul.addr %s264, 128
        %s266 = scalar_lea.vmem [#allocation5], %s265
        // Predicated region
        $region41: #{tpu_custom_call.1} parent=35 // pred_check
          %p267 = pneg %p82
        $region42: #{tpu_custom_call.1} parent=35 // pred_check_branch
          %269 = sbr.rel (%p267) target = $region44
        $region43: #{tpu_custom_call.1} parent=35 // pred_region
          %271 = dma.done %s263, 2048
        $region44: #{tpu_custom_call.1} parent=35 // pred_fallthru
          _
        %s272 = sand.u32 %s21, 1
        %s273 = scalar_lea.sflag [#allocation6], %s272
        %s274 = sand.u32 %s116, 1
        %s275 = smul.addr %s274, 16
        %s276 = scalar_lea.vmem [#allocation7], %s275
        // Predicated region
        $region45: #{tpu_custom_call.1} parent=35 // pred_check
          %p277 = pneg %p129
        $region46: #{tpu_custom_call.1} parent=35 // pred_check_branch
          %279 = sbr.rel (%p277) target = $region48
        $region47: #{tpu_custom_call.1} parent=35 // pred_region
          %281 = dma.done %s273, 256
        $region48: #{tpu_custom_call.1} parent=35 // pred_fallthru
          _
        %s282 = sand.u32 %s43, 1
        %s283 = scalar_lea.sflag [#allocation4], %s282
        %s284 = sand.u32 %s43, 1
        %s285 = smul.addr %s284, 16
        %s286 = scalar_lea.vmem [#allocation3], %s285
        %p287 = pneg %p56
        %p288 = pneg %p53
        %s289 = sand.u32 %s21, 1
        %s290 = scalar_lea.sflag [#allocation6], %s289
        %s291 = sand.u32 %s69, 1
        %s292 = smul.addr %s291, 128
        %s293 = scalar_lea.vmem [#allocation5], %s292
        %p294 = pneg %p82
        %p295 = pneg %p79
        %p296 = pneg %p103
        %p297 = pneg %p100
        %s298 = sand.u32 %s21, 1
        %s299 = scalar_lea.sflag [#allocation6], %s298
        %s300 = sand.u32 %s116, 1
        %s301 = smul.addr %s300, 16
        %s302 = scalar_lea.vmem [#allocation7], %s301
        %p303 = pneg %p129
        %p304 = pneg %p126
        %p305 = pneg %p155
        %p306 = pneg %p152
        %s307 = smul.u32 2, %s25
        %p308 = scmp.lt.s32.totalorder %s307, 3
        %s309 = scalar_select %p308, %s307, 3
        %s310 = smul.addr %s309, 8
        %s311 = scalar_lea.vmem %s4, %s310
        %s312 = smul.u32 2, %s25
        %s313 = smul.u32 16, %s26
        %s314 = smul.u32 2, %s25
        %s315 = smul.u32 2, %s25
        %p316 = scmp.lt.s32.totalorder %s315, 3
        %s317 = scalar_select %p316, %s315, 3
        %s318 = smul.addr %s317, 8
        %s319 = scalar_lea.vmem %s4, %s318
        %s320 = smul.u32 2, %s25
        %p321 = scmp.eq.s32.totalorder %s26, 0
        // Predicated region
        $region49: #{tpu_custom_call.1} parent=35 // pred_check
          %p322 = pneg %p321
        $region50: #{tpu_custom_call.1} parent=35 // pred_check_branch
          %324 = sbr.rel (%p322) target = $region52
        $region51: #{tpu_custom_call.1} parent=35 // pred_region
          %325 = vst [vmem:[#allocation2] sm:$0xff] 0.0
          %326 = vst [vmem:[#allocation2 + $0x8] sm:$0xff] 0.0
        $region52: #{tpu_custom_call.1} parent=35 // pred_fallthru
          _
        %v327 = vld [vmem:[#allocation2] sm:$0xff]
        %v328 = vld [vmem:[#allocation2 + $0x8] sm:$0xff]
        %v329 = vld [vmem:[%s256] sm:$0xff]
        %v330 = vld [vmem:[%s256 + $0x8] sm:$0xff]
        %v331 = vld [vmem:[%s266] sm:$0xff]
        %v332 = vld [vmem:[%s266 + $0x8] sm:$0xff]
        %v333 = vld [vmem:[%s266 + $0x10] sm:$0xff]
        %v334 = vld [vmem:[%s266 + $0x18] sm:$0xff]
        %v335 = vld [vmem:[%s266 + $0x20] sm:$0xff]
        %v336 = vld [vmem:[%s266 + $0x28] sm:$0xff]
        %v337 = vld [vmem:[%s266 + $0x30] sm:$0xff]
        %v338 = vld [vmem:[%s266 + $0x38] sm:$0xff]
        %v339 = vld [vmem:[%s266 + $0x40] sm:$0xff]
        %v340 = vld [vmem:[%s266 + $0x48] sm:$0xff]
        %v341 = vld [vmem:[%s266 + $0x50] sm:$0xff]
        %v342 = vld [vmem:[%s266 + $0x58] sm:$0xff]
        %v343 = vld [vmem:[%s266 + $0x60] sm:$0xff]
        %v344 = vld [vmem:[%s266 + $0x68] sm:$0xff]
        %v345 = vld [vmem:[%s266 + $0x70] sm:$0xff]
        %v346 = vld [vmem:[%s266 + $0x78] sm:$0xff]
        %347 = vmatpush.msra.mxu0 %v346
        %348 = vmatpush.msra.mxu0 %v345
        %349 = vmatpush.msra.mxu0 %v344
        %350 = vmatpush.msra.mxu0 %v343
        %351 = vmatpush.msra.mxu0 %v342
        %352 = vmatpush.msra.mxu0 %v341
        %353 = vmatpush.msra.mxu0 %v340
        %354 = vmatpush.msra.mxu0 %v339
        %355 = vmatpush.msra.mxu0 %v338
        %356 = vmatpush.msra.mxu0 %v337
        %357 = vmatpush.msra.mxu0 %v336
        %358 = vmatpush.msra.mxu0 %v335
        %359 = vmatpush.msra.mxu0 %v334
        %360 = vmatpush.msra.mxu0 %v333
        %361 = vmatpush.msra.mxu0 %v332
        %362 = vmatpush.msra.mxu0 %v331
        %363 = vmatmul.f32.gmra.mxu0 %v329
        %v364 = vpop.f32.mrf.mxu0
        %v365 = vadd.f32 0.0, %v364
        %366 = vmatmul.f32.gmra.mxu0 %v330
        %v367 = vpop.f32.mrf.mxu0
        %v368 = vadd.f32 0.0, %v367
        %369 = vdwg.mxu0
        %v370 = vadd.f32 %v327, %v365
        %v371 = vadd.f32 %v328, %v368
        %372 = vst [vmem:[#allocation2] sm:$0xff] %v370
        %373 = vst [vmem:[#allocation2 + $0x8] sm:$0xff] %v371
        %p374 = scmp.eq.s32.totalorder %s26, 2
        // Predicated region
        $region53: #{tpu_custom_call.1} parent=35 // pred_check
          %p375 = pneg %p374
        $region54: #{tpu_custom_call.1} parent=35 // pred_check_branch
          %377 = sbr.rel (%p375) target = $region56
        $region55: #{tpu_custom_call.1} parent=35 // pred_region
          %v378 = vld [vmem:[#allocation2] sm:$0xff]
          %v379 = vld [vmem:[#allocation2 + $0x8] sm:$0xff]
          %v380 = vld [vmem:[%s2] sm:$0x1]
          %v382 = vperm.slane %v380, 0
          %v384 = vadd.f32 %v378, %v382
          %v385 = vadd.f32 %v379, %v382
          %v386 = vld [vmem:[%s276] sm:$0xff]
          %v387 = vld [vmem:[%s276 + $0x8] sm:$0xff]
          %v388 = vsub.f32 %v384, %v386
          %v389 = vsub.f32 %v385, %v387
          %v390 = vmul.f32 %v388, %v388
          %v391 = vmul.f32 %v389, %v389
          %392 = vadd.xlane.f32.xlu0 %v390
          %v393 = vpop.xlane.xlu0 %392
          %394 = vadd.xlane.f32.xlu0 %v391
          %v395 = vpop.xlane.xlu0 %394
          %vm396 = vcmask 7168
          %397 = vst.msk [vmem:[%s319] sm:$0xff] %vm396, %v393
          %398 = vst.msk [vmem:[%s319 + $0x8] sm:$0xff] %vm396, %v395
        $region56: #{tpu_custom_call.1} parent=35 // pred_fallthru
          _
        %s399 = smul.u32 2, %s25
        %p400 = scmp.lt.s32.totalorder %s399, 3
        %s401 = scalar_select %p400, %s399, 3
        %s402 = smul.addr %s401, 8
        %s403 = scalar_lea.vmem %s4, %s402
        // Predicated region
        $region57: #{tpu_custom_call.1} parent=35 // pred_check
          %p404 = pneg %p152
        $region58: #{tpu_custom_call.1} parent=35 // pred_check_branch
          %406 = sbr.rel (%p404) target = $region60
        $region59: #{tpu_custom_call.1} parent=35 // pred_region
          %s407 = smul.u32 2, %s25
        $region60: #{tpu_custom_call.1} parent=35 // pred_fallthru
          _
      $region36: #{tpu_custom_call.1} parent=5 // pred_fallthru
        _
      %p408 = scmp.le.s32.totalorder 2, %s16
      // Predicated region
      $region61: #{tpu_custom_call.1} parent=5 // pred_check
        %p409 = pneg %p408
      $region62: #{tpu_custom_call.1} parent=5 // pred_check_branch
        %411 = sbr.rel (%p409) target = $region64
      $region63: #{tpu_custom_call.1} parent=5 // pred_region
        %s412 = ssub.s32 %s16, 2
        // Predicated region
        $region65: #{tpu_custom_call.1} parent=63 // pred_check
          %p413 = pneg %p158
        $region66: #{tpu_custom_call.1} parent=63 // pred_check_branch
          %415 = sbr.rel (%p413) target = $region68
        $region67: #{tpu_custom_call.1} parent=63 // pred_region
          %s416 = smul.u32 2, %s27
          %p417 = scmp.lt.s32.totalorder %s416, 3
          %s418 = scalar_select %p417, %s416, 3
          %s419 = smul.addr %s418, 8
          %s420 = scalar_lea.vmem %s4, %s419
        $region68: #{tpu_custom_call.1} parent=63 // pred_fallthru
          _
      $region64: #{tpu_custom_call.1} parent=5 // pred_fallthru
        _
    $region6: #{tpu_custom_call.1} parent=1 // loop_footer
      %s20 = sadd.s32 1, %s16
    $region7: #{tpu_custom_call.1} parent=1 // loop_footer_branch
      %15 = sbr.rel target = $region3
    $region8: #{tpu_custom_call.1} parent=1 // loop_exit
      _
    %421 = vsyncpa [#allocation4], 1
    %s422 = scalar_lea.sflag [#allocation4], 1
    %423 = vsyncpa %s422, 1
    %424 = vsyncpa [#allocation6], 1
    %s425 = scalar_lea.sflag [#allocation6], 1
    %426 = vsyncpa %s425, 1

</llo_original>
